<compile_context>
chip_gen: v5e
topology: v5e:2x2
jax: 0.10.0
libtpu: 0.0.40
codegen_flags: <defaults>
</compile_context>

<pallas_src>
import functools

import jax
import jax.numpy as jnp
from jax.experimental import pallas as pl
from jax.experimental.pallas import tpu as pltpu


def _round_up(n, m):
    return ((n + m - 1) // m) * m


def _plan_tiles(n):
    """Return (n_pad, tq, tk). tq is a multiple of 8, tk a multiple of 128,
    and both divide n_pad, so the flash-style tiling never degenerates."""
    if n <= 1024:
        tq = tk = 128
        n_pad = _round_up(n, 128)
    else:
        tq, tk = 256, 512
        n_pad = _round_up(n, 512)
    return n_pad, tq, tk


def _proj_kernel(x_ref, w_ref, wa1_ref, wa2_ref, wh_ref, f1_ref, f2_ref):
    """One row tile of the head-fused projection.

    wh = x @ W_all          (bf16 MXU operands, f32 accumulate, stored bf16)
    f1 = x @ (W_h @ a1_h)   per head -> (tq, nheads), f32
    f2 = x @ (W_h @ a2_h)   per head -> (tq, nheads), f32
    """
    x = x_ref[...]                                            # (tq, F) f32
    wh_ref[...] = jnp.dot(x.astype(jnp.bfloat16), w_ref[...],
                          preferred_element_type=jnp.float32).astype(wh_ref.dtype)
    f1_ref[...] = jnp.dot(x, wa1_ref[...], preferred_element_type=jnp.float32)
    f2_ref[...] = jnp.dot(x, wa2_ref[...], preferred_element_type=jnp.float32)


def _gat_attn_kernel(wh_ref, f1_ref, f2_ref, adj_ref, out_ref,
                     m_ref, l_ref, acc_ref, *,
                     nheads, nhid, alpha, tk, resident):
    """One (row-tile, col-tile) step of the flash-style GAT attention.

    wh_ref:  resident -> (N_pad, NH) bf16 (full, VMEM-resident); else (tk, NH)
    f1_ref:  (tq, nheads) f32        per-query-row attention terms
    f2_ref:  (nheads, tk) f32        per-key-column attention terms (pre-transposed)
    adj_ref: (tq, tk) int8           adjacency tile (>0 means edge)
    out_ref: (tq, NH) f32            concatenated ELU(h') output slab
    scratch: m (tq, nheads), l (tq, nheads), acc (tq, NH)
    """
    k = pl.program_id(1)
    num_k = pl.num_programs(1)

    @pl.when(k == 0)
    def _init():
        m_ref[...] = jnp.full_like(m_ref, -jnp.inf)
        l_ref[...] = jnp.zeros_like(l_ref)
        acc_ref[...] = jnp.zeros_like(acc_ref)

    if resident:
        start = pl.multiple_of(k * tk, tk)
        wh_k = wh_ref[pl.ds(start, tk), :]                    # (tk, NH) bf16
    else:
        wh_k = wh_ref[...]                                    # (tk, NH) bf16

    # Adjacency mask as an additive bias, computed once per tile.
    bias = jnp.where(adj_ref[...] > 0, jnp.float32(0.0), jnp.float32(-9e15))

    f1_all = f1_ref[...]                                      # (tq, nheads)
    f2_all = f2_ref[...]                                      # (nheads, tk)
    m_prev = m_ref[...]                                       # (tq, nheads)
    l_prev = l_ref[...]                                       # (tq, nheads)
    acc_prev = acc_ref[...]                                   # (tq, NH)

    m_out, l_out, acc_out = [], [], []
    for h in range(nheads):                                   # static unroll (small)
        hs = slice(h * nhid, (h + 1) * nhid)
        e = f1_all[:, h:h + 1] + f2_all[h:h + 1, :]           # (tq, tk)
        e = jnp.where(e > 0, e, alpha * e) + bias             # LeakyReLU, then mask

        # Online-softmax update (flash-attention style), kept in locals.
        m_prev_h = m_prev[:, h:h + 1]
        m_new = jnp.maximum(m_prev_h, jnp.max(e, axis=1, keepdims=True))
        p = jnp.exp(e - m_new)                                # (tq, tk)
        corr = jnp.exp(m_prev_h - m_new)                      # (tq, 1)
        l_out.append(corr * l_prev[:, h:h + 1]
                     + jnp.sum(p, axis=1, keepdims=True))
        pv = jnp.dot(p.astype(wh_k.dtype), wh_k[:, hs],
                     preferred_element_type=jnp.float32)      # (tq, H)
        acc_out.append(corr * acc_prev[:, hs] + pv)
        m_out.append(m_new)

    # Single lane-dense store per scratch ref per grid step.
    m_new_all = jnp.concatenate(m_out, axis=1)
    l_new_all = jnp.concatenate(l_out, axis=1)
    acc_new_all = jnp.concatenate(acc_out, axis=1)
    m_ref[...] = m_new_all
    l_ref[...] = l_new_all
    acc_ref[...] = acc_new_all

    @pl.when(k == num_k - 1)
    def _finalize():
        inv_l = pl.reciprocal(l_new_all, approx=True)         # (tq, nheads), one EUP op
        outs = []
        for h in range(nheads):
            hs = slice(h * nhid, (h + 1) * nhid)
            hp = acc_new_all[:, hs] * inv_l[:, h:h + 1]       # (tq, H)
            # ELU; negative branch uses exp(min(x,0))-1 so it stays finite.
            outs.append(jnp.where(hp > 0, hp,
                                  jnp.exp(jnp.minimum(hp, 0.0)) - 1.0))
        out_ref[...] = jnp.concatenate(outs, axis=1).astype(out_ref.dtype)


def gat_forward(x, adj, W, a, *, alpha=0.2):
    """x: (N, F), adj: (N, N) numeric, W: (nheads, F, H), a: (nheads, 2H, 1).

    Returns (N, nheads * H) — heads concatenated along the feature axis,
    matching torch.cat([att(x, adj) for att in heads], dim=1) in eval mode.
    """
    N, F = x.shape
    nheads, _, H = W.shape
    NH = nheads * H

    # F.dropout is identity in inference mode.
    # TODO(synk): training-mode dropout not implemented.

    n_pad, tq, tk = _plan_tiles(N)
    num_q = n_pad // tq
    num_k = n_pad // tk

    # Head-fused weight layout: W_all[:, h*H:(h+1)*H] == W[h].
    W_all = jnp.transpose(W, (1, 0, 2)).reshape(F, NH)
    a1 = a[:, :H, 0]                                          # (nheads, H)
    a2 = a[:, H:, 0]                                          # (nheads, H)
    # Fold the attention vectors into the projection: f1 = x @ wa1, f2 = x @ wa2.
    wa1 = jnp.einsum('hfd,hd->fh', W, a1).astype(jnp.float32)  # (F, nheads)
    wa2 = jnp.einsum('hfd,hd->fh', W, a2).astype(jnp.float32)  # (F, nheads)

    # Pad N up to a tile multiple; padded rows get a self-loop (benign softmax),
    # padded feature rows are zero, and padded outputs are sliced off below.
    x_pad = jnp.zeros((n_pad, F), jnp.float32).at[:N].set(x.astype(jnp.float32))
    adj_p = jnp.zeros((n_pad, n_pad), jnp.int8).at[:N, :N].set(
        (adj > 0).astype(jnp.int8))
    if n_pad > N:
        idx = jnp.arange(N, n_pad)
        adj_p = adj_p.at[idx, idx].set(jnp.int8(1))

    # ------------- projection: Wh, f1, f2 in one MXU pass per row tile ----------
    wh, f1, f2 = pl.pallas_call(
        _proj_kernel,
        out_shape=(jax.ShapeDtypeStruct((n_pad, NH), jnp.bfloat16),
                   jax.ShapeDtypeStruct((n_pad, nheads), jnp.float32),
                   jax.ShapeDtypeStruct((n_pad, nheads), jnp.float32)),
        grid_spec=pltpu.PrefetchScalarGridSpec(
            num_scalar_prefetch=0,
            grid=(num_q,),
            in_specs=[
                pl.BlockSpec((tq, F), lambda i: (i, 0)),
                pl.BlockSpec((F, NH), lambda i: (0, 0)),
                pl.BlockSpec((F, nheads), lambda i: (0, 0)),
                pl.BlockSpec((F, nheads), lambda i: (0, 0)),
            ],
            out_specs=[
                pl.BlockSpec((tq, NH), lambda i: (i, 0)),
                pl.BlockSpec((tq, nheads), lambda i: (i, 0)),
                pl.BlockSpec((tq, nheads), lambda i: (i, 0)),
            ],
        ),
        compiler_params=pltpu.CompilerParams(
            dimension_semantics=("parallel",)),
    )(x_pad, W_all.astype(jnp.bfloat16), wa1, wa2)

    f2t = f2.T                                                # (nheads, n_pad), once

    # Keep Wh fully resident in VMEM when small; otherwise stream (tk, NH) tiles.
    resident = (n_pad * NH * 2) <= (4 << 20)
    if resident:
        wh_spec = pl.BlockSpec((n_pad, NH), lambda i, k: (0, 0))
    else:
        wh_spec = pl.BlockSpec((tk, NH), lambda i, k: (k, 0))

    wh_bytes = n_pad * NH * 2
    cost = pl.CostEstimate(
        flops=int(2 * nheads * n_pad * n_pad * H + 10 * nheads * n_pad * n_pad),
        transcendentals=int(2 * nheads * n_pad * n_pad),
        bytes_accessed=int(n_pad * n_pad                       # adj (int8), read once
                           + (1 if resident else num_q) * wh_bytes
                           + n_pad * nheads * 4                # f1
                           + num_q * n_pad * nheads * 4        # f2 per row tile
                           + n_pad * NH * 4),                  # output
    )

    kernel = functools.partial(_gat_attn_kernel,
                               nheads=int(nheads), nhid=int(H),
                               alpha=float(alpha), tk=int(tk),
                               resident=bool(resident))

    out_pad = pl.pallas_call(
        kernel,
        out_shape=jax.ShapeDtypeStruct((n_pad, NH), jnp.float32),
        grid_spec=pltpu.PrefetchScalarGridSpec(
            num_scalar_prefetch=0,
            grid=(num_q, num_k),
            in_specs=[
                wh_spec,                                          # Wh (values)
                pl.BlockSpec((tq, nheads), lambda i, k: (i, 0)),  # f1 (query rows)
                pl.BlockSpec((nheads, tk), lambda i, k: (0, k)),  # f2 (key cols)
                pl.BlockSpec((tq, tk), lambda i, k: (i, k)),      # adjacency tile
            ],
            out_specs=pl.BlockSpec((tq, NH), lambda i, k: (i, 0)),
            scratch_shapes=[
                pltpu.VMEM((tq, nheads), jnp.float32),   # running max m
                pltpu.VMEM((tq, nheads), jnp.float32),   # running denom l
                pltpu.VMEM((tq, NH), jnp.float32),       # running weighted values
            ],
        ),
        compiler_params=pltpu.CompilerParams(
            dimension_semantics=("parallel", "arbitrary")),
        cost_estimate=cost,
    )(wh, f1, f2t, adj_p)

    return out_pad[:N]


def _gat_reference(x, adj, W, a, alpha):
    """Pure-JAX f32 reference of the PyTorch GAT (concat=True, eval mode)."""
    nheads, _, H = W.shape
    outs = []
    for h in range(nheads):
        Wh = x @ W[h]
        f1 = Wh @ a[h, :H, :]
        f2 = Wh @ a[h, H:, :]
        e = f1 + f2.T
        e = jnp.where(e > 0, e, alpha * e)
        e = jnp.where(adj > 0, e, -9e15)
        att = jax.nn.softmax(e, axis=1)
        hp = att @ Wh
        outs.append(jnp.where(hp > 0, hp, jnp.exp(jnp.minimum(hp, 0.0)) - 1.0))
    return jnp.concatenate(outs, axis=1)


if __name__ == "__main__":
    key = jax.random.PRNGKey(0)
    # N not a multiple of 128 -> exercises padding, the 3x3 flash tiling and the
    # resident-Wh dynamic-slice path.
    N, nfeat, nhid, nheads = 300, 32, 16, 2
    alpha = 0.2

    k_x, k_adj, k_w, k_a = jax.random.split(key, 4)

    x = jax.random.normal(k_x, (N, nfeat), dtype=jnp.float32)

    # Random sparse symmetric adjacency with self-loops.
    adj_rand = jax.random.uniform(k_adj, (N, N))
    adj = (adj_rand > 0.9).astype(jnp.float32)
    adj = jnp.maximum(adj, adj.T)
    adj = jnp.maximum(adj, jnp.eye(N, dtype=jnp.float32))

    # Deterministic "xavier-like" init for W (nfeat->nhid) and a (2*nhid->1) per head.
    w_scale = (6.0 / (nfeat + nhid)) ** 0.5 * 1.414
    a_scale = (6.0 / (2 * nhid + 1)) ** 0.5 * 1.414
    W = jax.random.uniform(k_w, (nheads, nfeat, nhid),
                           minval=-w_scale, maxval=w_scale, dtype=jnp.float32)
    a = jax.random.uniform(k_a, (nheads, 2 * nhid, 1),
                           minval=-a_scale, maxval=a_scale, dtype=jnp.float32)

    out = gat_forward(x, adj, W, a, alpha=alpha)
    jax.block_until_ready(out)

    assert out.shape == (N, nheads * nhid), out.shape
    assert bool(jnp.all(jnp.isfinite(out)))

    ref = _gat_reference(x, adj, W, a, alpha)
    # bf16 Wh / P streams round the value path slightly; 2e-2 still catches any
    # algorithmic error (which would be O(1)).
    err = float(jnp.max(jnp.abs(out - ref)))
    assert bool(jnp.allclose(out, ref, rtol=2e-2, atol=2e-2)), err

    print("KERNEL_OK")
</pallas_src>

<mosaic_0001>
module attributes {stable_mosaic.version = 11 : i64} {
  func.func @_proj_kernel(%arg0: i32, %arg1: memref<128x32xf32, #tpu.memory_space<vmem>>, %arg2: memref<32x32xbf16, #tpu.memory_space<vmem>>, %arg3: memref<32x2xf32, #tpu.memory_space<vmem>>, %arg4: memref<32x2xf32, #tpu.memory_space<vmem>>, %arg5: memref<128x32xbf16, #tpu.memory_space<vmem>>, %arg6: memref<128x2xf32, #tpu.memory_space<vmem>>, %arg7: memref<128x2xf32, #tpu.memory_space<vmem>>) attributes {dimension_semantics = [#tpu.dimension_semantics<parallel>], iteration_bounds = array<i64: 3>, scalar_prefetch = 0 : i64, scratch_operands = 0 : i64, tpu.core_type = #tpu.core_type<tc>, window_params = [{transform_indices = @transform_0, window_bounds = array<i64: 128, 32>}, {pipeline_mode = #tpu.pipeline_mode<synchronous>, transform_indices = @transform_1, window_bounds = array<i64: 32, 32>}, {pipeline_mode = #tpu.pipeline_mode<synchronous>, transform_indices = @transform_2, window_bounds = array<i64: 32, 2>}, {pipeline_mode = #tpu.pipeline_mode<synchronous>, transform_indices = @transform_3, window_bounds = array<i64: 32, 2>}, {transform_indices = @transform_4, window_bounds = array<i64: 128, 32>}, {transform_indices = @transform_5, window_bounds = array<i64: 128, 2>}, {transform_indices = @transform_6, window_bounds = array<i64: 128, 2>}]} {
    %c0 = arith.constant 0 : index
    %c0_0 = arith.constant 0 : index
    %0 = vector.load %arg1[%c0, %c0_0] : memref<128x32xf32, #tpu.memory_space<vmem>>, vector<128x32xf32>
    %1 = arith.truncf %0 : vector<128x32xf32> to vector<128x32xbf16>
    %c0_1 = arith.constant 0 : index
    %c0_2 = arith.constant 0 : index
    %2 = vector.load %arg2[%c0_1, %c0_2] : memref<32x32xbf16, #tpu.memory_space<vmem>>, vector<32x32xbf16>
    %cst = arith.constant dense<0.000000e+00> : vector<128x32xf32>
    %3 = tpu.matmul %1, %2, %cst {dimension_numbers = #tpu.dot_dimension_numbers<[1], [0], [0], [1], [0, 0, 1, 1], [], []>} : vector<128x32xbf16>, vector<32x32xbf16>, vector<128x32xf32> -> vector<128x32xf32>
    %4 = arith.truncf %3 : vector<128x32xf32> to vector<128x32xbf16>
    %c0_3 = arith.constant 0 : index
    %c0_4 = arith.constant 0 : index
    %5 = vector.load %arg5[%c0_3, %c0_4] : memref<128x32xbf16, #tpu.memory_space<vmem>>, vector<128x32xbf16>
    tpu.vector_store %arg5[%c0_3, %c0_4], %4 {strides = array<i32>} : memref<128x32xbf16, #tpu.memory_space<vmem>>, vector<128x32xbf16>,
    %c0_5 = arith.constant 0 : index
    %c0_6 = arith.constant 0 : index
    %6 = vector.load %arg3[%c0_5, %c0_6] : memref<32x2xf32, #tpu.memory_space<vmem>>, vector<32x2xf32>
    %cst_7 = arith.constant dense<0.000000e+00> : vector<128x2xf32>
    %7 = tpu.matmul %0, %6, %cst_7 {dimension_numbers = #tpu.dot_dimension_numbers<[1], [0], [0], [1], [0, 0, 1, 1], [], []>} : vector<128x32xf32>, vector<32x2xf32>, vector<128x2xf32> -> vector<128x2xf32>
    %c0_8 = arith.constant 0 : index
    %c0_9 = arith.constant 0 : index
    %8 = vector.load %arg6[%c0_8, %c0_9] : memref<128x2xf32, #tpu.memory_space<vmem>>, vector<128x2xf32>
    tpu.vector_store %arg6[%c0_8, %c0_9], %7 {strides = array<i32>} : memref<128x2xf32, #tpu.memory_space<vmem>>, vector<128x2xf32>,
    %c0_10 = arith.constant 0 : index
    %c0_11 = arith.constant 0 : index
    %9 = vector.load %arg4[%c0_10, %c0_11] : memref<32x2xf32, #tpu.memory_space<vmem>>, vector<32x2xf32>
    %cst_12 = arith.constant dense<0.000000e+00> : vector<128x2xf32>
    %10 = tpu.matmul %0, %9, %cst_12 {dimension_numbers = #tpu.dot_dimension_numbers<[1], [0], [0], [1], [0, 0, 1, 1], [], []>} : vector<128x32xf32>, vector<32x2xf32>, vector<128x2xf32> -> vector<128x2xf32>
    %c0_13 = arith.constant 0 : index
    %c0_14 = arith.constant 0 : index
    %11 = vector.load %arg7[%c0_13, %c0_14] : memref<128x2xf32, #tpu.memory_space<vmem>>, vector<128x2xf32>
    tpu.vector_store %arg7[%c0_13, %c0_14], %10 {strides = array<i32>} : memref<128x2xf32, #tpu.memory_space<vmem>>, vector<128x2xf32>,
    return
  }
  func.func @transform_0(%arg0: i32) -> (i32, i32) {
    %c0_i32 = arith.constant 0 : i32
    %c0_i32_0 = arith.constant 0 : i32
    return %arg0, %c0_i32 : i32, i32
  }
  func.func @transform_1(%arg0: i32) -> (i32, i32) {
    %c0_i32 = arith.constant 0 : i32
    %c0_i32_0 = arith.constant 0 : i32
    %c0_i32_1 = arith.constant 0 : i32
    return %c0_i32, %c0_i32_0 : i32, i32
  }
  func.func @transform_2(%arg0: i32) -> (i32, i32) {
    %c0_i32 = arith.constant 0 : i32
    %c0_i32_0 = arith.constant 0 : i32
    %c0_i32_1 = arith.constant 0 : i32
    return %c0_i32, %c0_i32_0 : i32, i32
  }
  func.func @transform_3(%arg0: i32) -> (i32, i32) {
    %c0_i32 = arith.constant 0 : i32
    %c0_i32_0 = arith.constant 0 : i32
    %c0_i32_1 = arith.constant 0 : i32
    return %c0_i32, %c0_i32_0 : i32, i32
  }
  func.func @transform_4(%arg0: i32) -> (i32, i32) {
    %c0_i32 = arith.constant 0 : i32
    %c0_i32_0 = arith.constant 0 : i32
    return %arg0, %c0_i32 : i32, i32
  }
  func.func @transform_5(%arg0: i32) -> (i32, i32) {
    %c0_i32 = arith.constant 0 : i32
    %c0_i32_0 = arith.constant 0 : i32
    return %arg0, %c0_i32 : i32, i32
  }
  func.func @transform_6(%arg0: i32) -> (i32, i32) {
    %c0_i32 = arith.constant 0 : i32
    %c0_i32_0 = arith.constant 0 : i32
    return %arg0, %c0_i32 : i32, i32
  }
}

</mosaic_0001>

<llo_original>
// kernel: tpu_custom_call.1
$region0: #{tpu_custom_call.1}
  #allocation0 [shape = 'u32[]', space=smem, size = 0x4, offset = 0x4, fixed_abs, tag = 'smem constant byte address 0x4 - core index']
  #allocation1 [shape = 'u32[72,128]{1,0:T(1,128)}', space=vmem, size = 0x9000, scoped, tag = 'internal scratch']
  %s0 = inlined_call_operand.vmem [shape: f32[384,32], index: 0, kind: input, shape index: {}]
  %s1 = inlined_call_operand.vmem [shape: bf16[32,32], index: 1, kind: input, shape index: {}]
  %s2 = inlined_call_operand.vmem [shape: f32[32,2], index: 2, kind: input, shape index: {}]
  %s3 = inlined_call_operand.vmem [shape: f32[32,2], index: 3, kind: input, shape index: {}]
  %s4 = inlined_call_operand.vmem [shape: bf16[384,32], index: 4, kind: output, shape index: {0}]
  %s5 = inlined_call_operand.vmem [shape: f32[384,2], index: 5, kind: output, shape index: {1}]
  %s6 = inlined_call_operand.vmem [shape: f32[384,2], index: 6, kind: output, shape index: {2}]
  %7 = xla_tuple %s4, %s5, %s6
  %s8 = sld [smem:[#allocation0]]
  $region65: #{tpu_custom_call.1} parent=0
    _
  %s10 = ssub.s32 1, %s8
  %s11 = scalar_select 0, %s10, %s8
  loop: start=0, step=1, limit=5
  $region2: #{tpu_custom_call.1} parent=0 // loop_pre_header
    _
  $region3: #{tpu_custom_call.1} parent=0 // loop_header
    %s13 = sphi 0, %s17
    %p14 = scmp.ge.s32.totalorder %s13, 5
    %s23 = sphi 0, %s25
    %s26 = sphi 0, %s23
    %s27 = sphi 0, %s26
    %s43 = sphi 0, %s27
    %s47 = sphi 0, %s47
    %s49 = sphi 0, %s47
    %s50 = sphi 0, %s49
    %s64 = sphi 0, %s50
    %s68 = sphi 0, %s68
    %s70 = sphi 0, %s68
    %s71 = sphi 0, %s70
    %s85 = sphi 0, %s71
    %s89 = sphi 0, %s89
    %s91 = sphi 0, %s89
    %s92 = sphi 0, %s91
    %s106 = sphi 0, %s92
    %s112 = sphi 0, %s114
    %s115 = sphi 0, %s112
    %s116 = sphi 0, %s115
    %s132 = sphi 0, %s116
    %s138 = sphi 0, %s140
    %s141 = sphi 0, %s138
    %s142 = sphi 0, %s141
    %s158 = sphi 0, %s142
    %s164 = sphi 0, %s166
    %s167 = sphi 0, %s164
    %s168 = sphi 0, %s167
    %s184 = sphi 0, %s168
  $region4: #{tpu_custom_call.1} parent=0 // loop_header_branch
    %16 = sbr.rel (%p14) target = $region8
  $region5: #{tpu_custom_call.1} parent=0 // loop_body
    %s18 = ssub.s32 %s13, 1
    %s19 = ssub.s32 %s13, 2
    %s20 = sadd.s32 %s13, 1
    %s21 = ssub.s32 %s13, %s20
    %p22 = scmp.eq.s32.totalorder %s21, 0
    %s24 = sadd.s32 %s23, 1
    %s25 = scalar_select %p22, %s23, %s24
    %p28 = pneg %p22
    %p29 = scmp.eq.s32.totalorder %s13, 2
    %p30 = por %p28, %p29
    %p31 = scmp.ne.s32.totalorder %s23, %s26
    %p32 = scmp.eq.s32.totalorder %s13, 0
    %p33 = por %p31, %p32
    %p34 = scmp.ne.s32.totalorder %s23, %s26
    %p35 = scmp.eq.s32.totalorder %s18, 2
    %p36 = por %p34, %p35
    %p37 = scmp.ne.s32.totalorder %s26, %s27
    %p38 = scmp.eq.s32.totalorder %s18, 0
    %p39 = por %p37, %p38
    %p40 = scmp.ne.s32.totalorder %s26, %s27
    %p41 = scmp.eq.s32.totalorder %s19, 2
    %p42 = por %p40, %p41
    %p44 = scmp.ne.s32.totalorder %s27, %s43
    %p45 = scmp.eq.s32.totalorder %s19, 0
    %p46 = por %p44, %p45
    %s48 = sadd.s32 %s47, 1
    %p51 = scmp.eq.s32.totalorder %s13, 2
    %p52 = scmp.ne.s32.totalorder %s47, %s49
    %p53 = scmp.eq.s32.totalorder %s13, 0
    %p54 = por %p52, %p53
    %p55 = scmp.ne.s32.totalorder %s47, %s49
    %p56 = scmp.eq.s32.totalorder %s18, 2
    %p57 = por %p55, %p56
    %p58 = scmp.ne.s32.totalorder %s49, %s50
    %p59 = scmp.eq.s32.totalorder %s18, 0
    %p60 = por %p58, %p59
    %p61 = scmp.ne.s32.totalorder %s49, %s50
    %p62 = scmp.eq.s32.totalorder %s19, 2
    %p63 = por %p61, %p62
    %p65 = scmp.ne.s32.totalorder %s50, %s64
    %p66 = scmp.eq.s32.totalorder %s19, 0
    %p67 = por %p65, %p66
    %s69 = sadd.s32 %s68, 1
    %p72 = scmp.eq.s32.totalorder %s13, 2
    %p73 = scmp.ne.s32.totalorder %s68, %s70
    %p74 = scmp.eq.s32.totalorder %s13, 0
    %p75 = por %p73, %p74
    %p76 = scmp.ne.s32.totalorder %s68, %s70
    %p77 = scmp.eq.s32.totalorder %s18, 2
    %p78 = por %p76, %p77
    %p79 = scmp.ne.s32.totalorder %s70, %s71
    %p80 = scmp.eq.s32.totalorder %s18, 0
    %p81 = por %p79, %p80
    %p82 = scmp.ne.s32.totalorder %s70, %s71
    %p83 = scmp.eq.s32.totalorder %s19, 2
    %p84 = por %p82, %p83
    %p86 = scmp.ne.s32.totalorder %s71, %s85
    %p87 = scmp.eq.s32.totalorder %s19, 0
    %p88 = por %p86, %p87
    %s90 = sadd.s32 %s89, 1
    %p93 = scmp.eq.s32.totalorder %s13, 2
    %p94 = scmp.ne.s32.totalorder %s89, %s91
    %p95 = scmp.eq.s32.totalorder %s13, 0
    %p96 = por %p94, %p95
    %p97 = scmp.ne.s32.totalorder %s89, %s91
    %p98 = scmp.eq.s32.totalorder %s18, 2
    %p99 = por %p97, %p98
    %p100 = scmp.ne.s32.totalorder %s91, %s92
    %p101 = scmp.eq.s32.totalorder %s18, 0
    %p102 = por %p100, %p101
    %p103 = scmp.ne.s32.totalorder %s91, %s92
    %p104 = scmp.eq.s32.totalorder %s19, 2
    %p105 = por %p103, %p104
    %p107 = scmp.ne.s32.totalorder %s92, %s106
    %p108 = scmp.eq.s32.totalorder %s19, 0
    %p109 = por %p107, %p108
    %s110 = ssub.s32 %s13, %s20
    %p111 = scmp.eq.s32.totalorder %s110, 0
    %s113 = sadd.s32 %s112, 1
    %s114 = scalar_select %p111, %s112, %s113
    %p117 = pneg %p111
    %p118 = scmp.eq.s32.totalorder %s13, 2
    %p119 = por %p117, %p118
    %p120 = scmp.ne.s32.totalorder %s112, %s115
    %p121 = scmp.eq.s32.totalorder %s13, 0
    %p122 = por %p120, %p121
    %p123 = scmp.ne.s32.totalorder %s112, %s115
    %p124 = scmp.eq.s32.totalorder %s18, 2
    %p125 = por %p123, %p124
    %p126 = scmp.ne.s32.totalorder %s115, %s116
    %p127 = scmp.eq.s32.totalorder %s18, 0
    %p128 = por %p126, %p127
    %p129 = scmp.ne.s32.totalorder %s115, %s116
    %p130 = scmp.eq.s32.totalorder %s19, 2
    %p131 = por %p129, %p130
    %p133 = scmp.ne.s32.totalorder %s116, %s132
    %p134 = scmp.eq.s32.totalorder %s19, 0
    %p135 = por %p133, %p134
    %s136 = ssub.s32 %s13, %s20
    %p137 = scmp.eq.s32.totalorder %s136, 0
    %s139 = sadd.s32 %s138, 1
    %s140 = scalar_select %p137, %s138, %s139
    %p143 = pneg %p137
    %p144 = scmp.eq.s32.totalorder %s13, 2
    %p145 = por %p143, %p144
    %p146 = scmp.ne.s32.totalorder %s138, %s141
    %p147 = scmp.eq.s32.totalorder %s13, 0
    %p148 = por %p146, %p147
    %p149 = scmp.ne.s32.totalorder %s138, %s141
    %p150 = scmp.eq.s32.totalorder %s18, 2
    %p151 = por %p149, %p150
    %p152 = scmp.ne.s32.totalorder %s141, %s142
    %p153 = scmp.eq.s32.totalorder %s18, 0
    %p154 = por %p152, %p153
    %p155 = scmp.ne.s32.totalorder %s141, %s142
    %p156 = scmp.eq.s32.totalorder %s19, 2
    %p157 = por %p155, %p156
    %p159 = scmp.ne.s32.totalorder %s142, %s158
    %p160 = scmp.eq.s32.totalorder %s19, 0
    %p161 = por %p159, %p160
    %s162 = ssub.s32 %s13, %s20
    %p163 = scmp.eq.s32.totalorder %s162, 0
    %s165 = sadd.s32 %s164, 1
    %s166 = scalar_select %p163, %s164, %s165
    %p169 = pneg %p163
    %p170 = scmp.eq.s32.totalorder %s13, 2
    %p171 = por %p169, %p170
    %p172 = scmp.ne.s32.totalorder %s164, %s167
    %p173 = scmp.eq.s32.totalorder %s13, 0
    %p174 = por %p172, %p173
    %p175 = scmp.ne.s32.totalorder %s164, %s167
    %p176 = scmp.eq.s32.totalorder %s18, 2
    %p177 = por %p175, %p176
    %p178 = scmp.ne.s32.totalorder %s167, %s168
    %p179 = scmp.eq.s32.totalorder %s18, 0
    %p180 = por %p178, %p179
    %p181 = scmp.ne.s32.totalorder %s167, %s168
    %p182 = scmp.eq.s32.totalorder %s19, 2
    %p183 = por %p181, %p182
    %p185 = scmp.ne.s32.totalorder %s168, %s184
    %p186 = scmp.eq.s32.totalorder %s19, 0
    %p187 = por %p185, %p186
    %p188 = scmp.le.s32.totalorder 1, %s13
    %p189 = scmp.lt.s32.totalorder %s13, 4
    %p190 = pnand %p188, %p189
    %p191 = pneg %p190
    // Predicated region
    $region9: #{tpu_custom_call.1} parent=5 // pred_check
      _
    $region10: #{tpu_custom_call.1} parent=5 // pred_check_branch
      %193 = sbr.rel (%p190) target = $region12
    $region11: #{tpu_custom_call.1} parent=5 // pred_region
      %s194 = ssub.s32 %s13, 1
      // Predicated region
      $region13: #{tpu_custom_call.1} parent=11 // pred_check
        %p195 = pneg %p60
      $region14: #{tpu_custom_call.1} parent=11 // pred_check_branch
        %197 = sbr.rel (%p195) target = $region16
      $region15: #{tpu_custom_call.1} parent=11 // pred_region
        _
      $region16: #{tpu_custom_call.1} parent=11 // pred_fallthru
        _
      // Predicated region
      $region17: #{tpu_custom_call.1} parent=11 // pred_check
        %p198 = pneg %p81
      $region18: #{tpu_custom_call.1} parent=11 // pred_check_branch
        %200 = sbr.rel (%p198) target = $region20
      $region19: #{tpu_custom_call.1} parent=11 // pred_region
        _
      $region20: #{tpu_custom_call.1} parent=11 // pred_fallthru
        _
      // Predicated region
      $region21: #{tpu_custom_call.1} parent=11 // pred_check
        %p201 = pneg %p102
      $region22: #{tpu_custom_call.1} parent=11 // pred_check_branch
        %203 = sbr.rel (%p201) target = $region24
      $region23: #{tpu_custom_call.1} parent=11 // pred_region
        _
      $region24: #{tpu_custom_call.1} parent=11 // pred_fallthru
        _
    $region12: #{tpu_custom_call.1} parent=5 // pred_fallthru
      _
    %p204 = scmp.lt.s32.totalorder %s13, 3
    // Predicated region
    $region25: #{tpu_custom_call.1} parent=5 // pred_check
      %p205 = pneg %p204
    $region26: #{tpu_custom_call.1} parent=5 // pred_check_branch
      %207 = sbr.rel (%p205) target = $region28
    $region27: #{tpu_custom_call.1} parent=5 // pred_region
      // Predicated region
      $region29: #{tpu_custom_call.1} parent=27 // pred_check
        %p208 = pneg %p33
      $region30: #{tpu_custom_call.1} parent=27 // pred_check_branch
        %210 = sbr.rel (%p208) target = $region32
      $region31: #{tpu_custom_call.1} parent=27 // pred_region
        %s211 = smul.u32 16, %s13
        %p212 = scmp.lt.s32.totalorder %s211, 47
        %s213 = scalar_select %p212, %s211, 47
        %s214 = smul.addr %s213, 8
        %s215 = scalar_lea.vmem %s0, %s214
        %s216 = smul.u32 16, %s13
      $region32: #{tpu_custom_call.1} parent=27 // pred_fallthru
        _
    $region28: #{tpu_custom_call.1} parent=5 // pred_fallthru
      _
    %p217 = scmp.le.s32.totalorder 1, %s13
    %p218 = scmp.lt.s32.totalorder %s13, 4
    %p219 = pnand %p217, %p218
    %p220 = pneg %p219
    // Predicated region
    $region33: #{tpu_custom_call.1} parent=5 // pred_check
      _
    $region34: #{tpu_custom_call.1} parent=5 // pred_check_branch
      %222 = sbr.rel (%p219) target = $region36
    $region35: #{tpu_custom_call.1} parent=5 // pred_region
      %s223 = ssub.s32 %s13, 1
      %s224 = smul.u32 16, %s18
      %p225 = scmp.lt.s32.totalorder %s224, 47
      %s226 = scalar_select %p225, %s224, 47
      %s227 = smul.addr %s226, 8
      %s228 = scalar_lea.vmem %s0, %s227
      %p229 = pneg %p39
      %p230 = pneg %p36
      %p231 = pneg %p60
      %p232 = pneg %p57
      %p233 = pneg %p81
      %p234 = pneg %p78
      %p235 = pneg %p102
      %p236 = pneg %p99
      %p237 = pneg %p128
      %p238 = pneg %p125
      %s239 = smul.u32 16, %s18
      %p240 = scmp.lt.s32.totalorder %s239, 47
      %s241 = scalar_select %p240, %s239, 47
      %s242 = smul.addr %s241, 4
      %s243 = scalar_lea.vmem %s4, %s242
      %p244 = pneg %p154
      %p245 = pneg %p151
      %s246 = smul.u32 16, %s18
      %p247 = scmp.lt.s32.totalorder %s246, 47
      %s248 = scalar_select %p247, %s246, 47
      %s249 = smul.addr %s248, 8
      %s250 = scalar_lea.vmem %s5, %s249
      %p251 = pneg %p180
      %p252 = pneg %p177
      %s253 = smul.u32 16, %s18
      %p254 = scmp.lt.s32.totalorder %s253, 47
      %s255 = scalar_select %p254, %s253, 47
      %s256 = smul.addr %s255, 8
      %s257 = scalar_lea.vmem %s6, %s256
      %s258 = smul.u32 16, %s18
      %p259 = scmp.lt.s32.totalorder %s258, 47
      %s260 = scalar_select %p259, %s258, 47
      %s261 = smul.addr %s260, 8
      %s262 = scalar_lea.vmem %s0, %s261
      %s263 = smul.u32 16, %s18
      %s264 = smul.u32 16, %s18
      %p265 = scmp.lt.s32.totalorder %s264, 47
      %s266 = scalar_select %p265, %s264, 47
      %s267 = smul.addr %s266, 4
      %s268 = scalar_lea.vmem %s4, %s267
      %s269 = smul.u32 16, %s18
      %s270 = smul.u32 16, %s18
      %p271 = scmp.lt.s32.totalorder %s270, 47
      %s272 = scalar_select %p271, %s270, 47
      %s273 = smul.addr %s272, 8
      %s274 = scalar_lea.vmem %s5, %s273
      %s275 = smul.u32 16, %s18
      %s276 = smul.u32 16, %s18
      %p277 = scmp.lt.s32.totalorder %s276, 47
      %s278 = scalar_select %p277, %s276, 47
      %s279 = smul.addr %s278, 8
      %s280 = scalar_lea.vmem %s6, %s279
      %s281 = smul.u32 16, %s18
      %v283 = vld [vmem:[%s262] sm:$0xff]
      %v284 = vld [vmem:[%s262 + $0x8] sm:$0xff]
      %v285 = vld [vmem:[%s262 + $0x10] sm:$0xff]
      %v286 = vld [vmem:[%s262 + $0x18] sm:$0xff]
      %v287 = vld [vmem:[%s262 + $0x20] sm:$0xff]
      %v288 = vld [vmem:[%s262 + $0x28] sm:$0xff]
      %v289 = vld [vmem:[%s262 + $0x30] sm:$0xff]
      %v290 = vld [vmem:[%s262 + $0x38] sm:$0xff]
      %v291 = vld [vmem:[%s262 + $0x40] sm:$0xff]
      %v292 = vld [vmem:[%s262 + $0x48] sm:$0xff]
      %v293 = vld [vmem:[%s262 + $0x50] sm:$0xff]
      %v294 = vld [vmem:[%s262 + $0x58] sm:$0xff]
      %v295 = vld [vmem:[%s262 + $0x60] sm:$0xff]
      %v296 = vld [vmem:[%s262 + $0x68] sm:$0xff]
      %v297 = vld [vmem:[%s262 + $0x70] sm:$0xff]
      %v298 = vld [vmem:[%s262 + $0x78] sm:$0xff]
      %v299 = vpack.c.bf16 %v284, %v283
      %v300 = vpack.c.bf16 %v286, %v285
      %v301 = vpack.c.bf16 %v288, %v287
      %v302 = vpack.c.bf16 %v290, %v289
      %v303 = vpack.c.bf16 %v292, %v291
      %v304 = vpack.c.bf16 %v294, %v293
      %v305 = vpack.c.bf16 %v296, %v295
      %v306 = vpack.c.bf16 %v298, %v297
      %v307 = vld [vmem:[%s1] sm:$0xf]
      %v308 = vld [vmem:[%s1 + $0x4] sm:$0xf]
      %v309 = vld [vmem:[%s1 + $0x8] sm:$0xf]
      %v310 = vld [vmem:[%s1 + $0xc] sm:$0xf]
      %v315 = vunpack.c.l.b16 %v307
      %v316 = vunpack.c.l.b16 %v308
      %v317 = vunpack.c.l.b16 %v309
      %v318 = vunpack.c.l.b16 %v310
      %v319 = vpack.c.b16 %v316, %v315
      %v320 = vpack.c.b16 %v318, %v317
      %vm323 = vcmask 261120
      %v325 = vsel %vm323, %v299, 0
      %v328 = vsel %vm323, %v300, 0
      %v331 = vsel %vm323, %v301, 0
      %v334 = vsel %vm323, %v302, 0
      %v337 = vsel %vm323, %v303, 0
      %v340 = vsel %vm323, %v304, 0
      %v343 = vsel %vm323, %v305, 0
      %v346 = vsel %vm323, %v306, 0
      %348 = vmatpush.bf16.msra.mxu0 0
      %349 = vmatpush.bf16.msra.mxu0 0
      %350 = vmatpush.bf16.msra.mxu0 0
      %351 = vmatpush.bf16.msra.mxu0 0
      %352 = vmatpush.bf16.msra.mxu0 0
      %353 = vmatpush.bf16.msra.mxu0 0
      %354 = vmatpush.bf16.msra.mxu0 %v320
      %355 = vmatpush.bf16.msra.mxu0 %v319
      %356 = vmatmul.bf16.gmra.mxu0 %v325
      %v357 = vpop.f32.mrf.mxu0
      %v358 = vadd.f32 0.0, %v357
      %v359 = vpop.f32.mrf.mxu0
      %v360 = vadd.f32 0.0, %v359
      %361 = vmatmul.bf16.gmra.mxu0 %v328
      %v362 = vpop.f32.mrf.mxu0
      %v363 = vadd.f32 0.0, %v362
      %v364 = vpop.f32.mrf.mxu0
      %v365 = vadd.f32 0.0, %v364
      %366 = vmatmul.bf16.gmra.mxu0 %v331
      %v367 = vpop.f32.mrf.mxu0
      %v368 = vadd.f32 0.0, %v367
      %v369 = vpop.f32.mrf.mxu0
      %v370 = vadd.f32 0.0, %v369
      %371 = vmatmul.bf16.gmra.mxu0 %v334
      %v372 = vpop.f32.mrf.mxu0
      %v373 = vadd.f32 0.0, %v372
      %v374 = vpop.f32.mrf.mxu0
      %v375 = vadd.f32 0.0, %v374
      %376 = vmatmul.bf16.gmra.mxu0 %v337
      %v377 = vpop.f32.mrf.mxu0
      %v378 = vadd.f32 0.0, %v377
      %v379 = vpop.f32.mrf.mxu0
      %v380 = vadd.f32 0.0, %v379
      %381 = vmatmul.bf16.gmra.mxu0 %v340
      %v382 = vpop.f32.mrf.mxu0
      %v383 = vadd.f32 0.0, %v382
      %v384 = vpop.f32.mrf.mxu0
      %v385 = vadd.f32 0.0, %v384
      %386 = vmatmul.bf16.gmra.mxu0 %v343
      %v387 = vpop.f32.mrf.mxu0
      %v388 = vadd.f32 0.0, %v387
      %v389 = vpop.f32.mrf.mxu0
      %v390 = vadd.f32 0.0, %v389
      %391 = vmatmul.bf16.gmra.mxu0 %v346
      %v392 = vpop.f32.mrf.mxu0
      %v393 = vadd.f32 0.0, %v392
      %v394 = vpop.f32.mrf.mxu0
      %v395 = vadd.f32 0.0, %v394
      %396 = vdwg.mxu0
      %v397 = vpack.c.bf16 %v358, %v358
      %v398 = vpack.c.bf16 %v360, %v360
      %v399 = vpack.c.bf16 %v363, %v363
      %v400 = vpack.c.bf16 %v365, %v365
      %v401 = vpack.c.bf16 %v368, %v368
      %v402 = vpack.c.bf16 %v370, %v370
      %v403 = vpack.c.bf16 %v373, %v373
      %v404 = vpack.c.bf16 %v375, %v375
      %v405 = vpack.c.bf16 %v378, %v378
      %v406 = vpack.c.bf16 %v380, %v380
      %v407 = vpack.c.bf16 %v383, %v383
      %v408 = vpack.c.bf16 %v385, %v385
      %v409 = vpack.c.bf16 %v388, %v388
      %v410 = vpack.c.bf16 %v390, %v390
      %v411 = vpack.c.bf16 %v393, %v393
      %v412 = vpack.c.bf16 %v395, %v395
      %vm413 = vcmask 257024
      %414 = vst.msk [vmem:[%s268] sm:$0xf] %vm413, %v397
      %415 = vst.msk [vmem:[%s268 + $0x4] sm:$0xf] %vm413, %v398
      %416 = vst.msk [vmem:[%s268 + $0x8] sm:$0xf] %vm413, %v399
      %417 = vst.msk [vmem:[%s268 + $0xc] sm:$0xf] %vm413, %v400
      %418 = vst.msk [vmem:[%s268 + $0x10] sm:$0xf] %vm413, %v401
      %419 = vst.msk [vmem:[%s268 + $0x14] sm:$0xf] %vm413, %v402
      %420 = vst.msk [vmem:[%s268 + $0x18] sm:$0xf] %vm413, %v403
      %421 = vst.msk [vmem:[%s268 + $0x1c] sm:$0xf] %vm413, %v404
      %422 = vst.msk [vmem:[%s268 + $0x20] sm:$0xf] %vm413, %v405
      %423 = vst.msk [vmem:[%s268 + $0x24] sm:$0xf] %vm413, %v406
      %424 = vst.msk [vmem:[%s268 + $0x28] sm:$0xf] %vm413, %v407
      %425 = vst.msk [vmem:[%s268 + $0x2c] sm:$0xf] %vm413, %v408
      %426 = vst.msk [vmem:[%s268 + $0x30] sm:$0xf] %vm413, %v409
      %427 = vst.msk [vmem:[%s268 + $0x34] sm:$0xf] %vm413, %v410
      %428 = vst.msk [vmem:[%s268 + $0x38] sm:$0xf] %vm413, %v411
      %429 = vst.msk [vmem:[%s268 + $0x3c] sm:$0xf] %vm413, %v412
      %v430 = vld [vmem:[%s2] sm:$0xff]
      %v431 = vld [vmem:[%s2 + $0x8] sm:$0xff]
      %v432 = vld [vmem:[%s2 + $0x10] sm:$0xff]
      %v433 = vld [vmem:[%s2 + $0x18] sm:$0xff]
      %v435 = vsel %vm323, %v283, 0
      %v438 = vsel %vm323, %v284, 0
      %v441 = vsel %vm323, %v285, 0
      %v444 = vsel %vm323, %v286, 0
      %v447 = vsel %vm323, %v287, 0
      %v450 = vsel %vm323, %v288, 0
      %v453 = vsel %vm323, %v289, 0
      %v456 = vsel %vm323, %v290, 0
      %v459 = vsel %vm323, %v291, 0
      %v462 = vsel %vm323, %v292, 0
      %v465 = vsel %vm323, %v293, 0
      %v468 = vsel %vm323, %v294, 0
      %v471 = vsel %vm323, %v295, 0
      %v474 = vsel %vm323, %v296, 0
      %v477 = vsel %vm323, %v297, 0
      %v480 = vsel %vm323, %v298, 0
      %482 = vmatpush.msra.mxu0 0.0
      %483 = vmatpush.msra.mxu0 0.0
      %484 = vmatpush.msra.mxu0 0.0
      %485 = vmatpush.msra.mxu0 0.0
      %486 = vmatpush.msra.mxu0 0.0
      %487 = vmatpush.msra.mxu0 0.0
      %488 = vmatpush.msra.mxu0 0.0
      %489 = vmatpush.msra.mxu0 0.0
      %490 = vmatpush.msra.mxu0 0.0
      %491 = vmatpush.msra.mxu0 0.0
      %492 = vmatpush.msra.mxu0 0.0
      %493 = vmatpush.msra.mxu0 0.0
      %494 = vmatpush.msra.mxu0 %v433
      %495 = vmatpush.msra.mxu0 %v432
      %496 = vmatpush.msra.mxu0 %v431
      %497 = vmatpush.msra.mxu0 %v430
      %498 = vmatmul.f32.gmra.mxu0 %v435
      %v499 = vpop.f32.mrf.mxu0
      %v500 = vadd.f32 0.0, %v499
      %501 = vmatmul.f32.gmra.mxu0 %v438
      %v502 = vpop.f32.mrf.mxu0
      %v503 = vadd.f32 0.0, %v502
      %504 = vmatmul.f32.gmra.mxu0 %v441
      %v505 = vpop.f32.mrf.mxu0
      %v506 = vadd.f32 0.0, %v505
      %507 = vmatmul.f32.gmra.mxu0 %v444
      %v508 = vpop.f32.mrf.mxu0
      %v509 = vadd.f32 0.0, %v508
      %510 = vmatmul.f32.gmra.mxu0 %v447
      %v511 = vpop.f32.mrf.mxu0
      %v512 = vadd.f32 0.0, %v511
      %513 = vmatmul.f32.gmra.mxu0 %v450
      %v514 = vpop.f32.mrf.mxu0
      %v515 = vadd.f32 0.0, %v514
      %516 = vmatmul.f32.gmra.mxu0 %v453
      %v517 = vpop.f32.mrf.mxu0
      %v518 = vadd.f32 0.0, %v517
      %519 = vmatmul.f32.gmra.mxu0 %v456
      %v520 = vpop.f32.mrf.mxu0
      %v521 = vadd.f32 0.0, %v520
      %522 = vmatmul.f32.gmra.mxu0 %v459
      %v523 = vpop.f32.mrf.mxu0
      %v524 = vadd.f32 0.0, %v523
      %525 = vmatmul.f32.gmra.mxu0 %v462
      %v526 = vpop.f32.mrf.mxu0
      %v527 = vadd.f32 0.0, %v526
      %528 = vmatmul.f32.gmra.mxu0 %v465
      %v529 = vpop.f32.mrf.mxu0
      %v530 = vadd.f32 0.0, %v529
      %531 = vmatmul.f32.gmra.mxu0 %v468
      %v532 = vpop.f32.mrf.mxu0
      %v533 = vadd.f32 0.0, %v532
      %534 = vmatmul.f32.gmra.mxu0 %v471
      %v535 = vpop.f32.mrf.mxu0
      %v536 = vadd.f32 0.0, %v535
      %537 = vmatmul.f32.gmra.mxu0 %v474
      %v538 = vpop.f32.mrf.mxu0
      %v539 = vadd.f32 0.0, %v538
      %540 = vmatmul.f32.gmra.mxu0 %v477
      %v541 = vpop.f32.mrf.mxu0
      %v542 = vadd.f32 0.0, %v541
      %543 = vmatmul.f32.gmra.mxu0 %v480
      %v544 = vpop.f32.mrf.mxu0
      %v545 = vadd.f32 0.0, %v544
      %546 = vdwg.mxu0
      %vm547 = vcmask 15360
      %548 = vst.msk [vmem:[%s274] sm:$0xff] %vm547, %v500
      %549 = vst.msk [vmem:[%s274 + $0x8] sm:$0xff] %vm547, %v503
      %550 = vst.msk [vmem:[%s274 + $0x10] sm:$0xff] %vm547, %v506
      %551 = vst.msk [vmem:[%s274 + $0x18] sm:$0xff] %vm547, %v509
      %552 = vst.msk [vmem:[%s274 + $0x20] sm:$0xff] %vm547, %v512
      %553 = vst.msk [vmem:[%s274 + $0x28] sm:$0xff] %vm547, %v515
      %554 = vst.msk [vmem:[%s274 + $0x30] sm:$0xff] %vm547, %v518
      %555 = vst.msk [vmem:[%s274 + $0x38] sm:$0xff] %vm547, %v521
      %556 = vst.msk [vmem:[%s274 + $0x40] sm:$0xff] %vm547, %v524
      %557 = vst.msk [vmem:[%s274 + $0x48] sm:$0xff] %vm547, %v527
      %558 = vst.msk [vmem:[%s274 + $0x50] sm:$0xff] %vm547, %v530
      %559 = vst.msk [vmem:[%s274 + $0x58] sm:$0xff] %vm547, %v533
      %560 = vst.msk [vmem:[%s274 + $0x60] sm:$0xff] %vm547, %v536
      %561 = vst.msk [vmem:[%s274 + $0x68] sm:$0xff] %vm547, %v539
      %562 = vst.msk [vmem:[%s274 + $0x70] sm:$0xff] %vm547, %v542
      %563 = vst.msk [vmem:[%s274 + $0x78] sm:$0xff] %vm547, %v545
      %v564 = vld [vmem:[%s3] sm:$0xff]
      %v565 = vld [vmem:[%s3 + $0x8] sm:$0xff]
      %v566 = vld [vmem:[%s3 + $0x10] sm:$0xff]
      %v567 = vld [vmem:[%s3 + $0x18] sm:$0xff]
      %568 = vmatpush.msra.mxu0 0.0
      %569 = vmatpush.msra.mxu0 0.0
      %570 = vmatpush.msra.mxu0 0.0
      %571 = vmatpush.msra.mxu0 0.0
      %572 = vmatpush.msra.mxu0 0.0
      %573 = vmatpush.msra.mxu0 0.0
      %574 = vmatpush.msra.mxu0 0.0
      %575 = vmatpush.msra.mxu0 0.0
      %576 = vmatpush.msra.mxu0 0.0
      %577 = vmatpush.msra.mxu0 0.0
      %578 = vmatpush.msra.mxu0 0.0
      %579 = vmatpush.msra.mxu0 0.0
      %580 = vmatpush.msra.mxu0 %v567
      %581 = vmatpush.msra.mxu0 %v566
      %582 = vmatpush.msra.mxu0 %v565
      %583 = vmatpush.msra.mxu0 %v564
      %584 = vmatmul.f32.gmra.mxu0 %v435
      %v585 = vpop.f32.mrf.mxu0
      %v586 = vadd.f32 0.0, %v585
      %587 = vmatmul.f32.gmra.mxu0 %v438
      %v588 = vpop.f32.mrf.mxu0
      %v589 = vadd.f32 0.0, %v588
      %590 = vmatmul.f32.gmra.mxu0 %v441
      %v591 = vpop.f32.mrf.mxu0
      %v592 = vadd.f32 0.0, %v591
      %593 = vmatmul.f32.gmra.mxu0 %v444
      %v594 = vpop.f32.mrf.mxu0
      %v595 = vadd.f32 0.0, %v594
      %596 = vmatmul.f32.gmra.mxu0 %v447
      %v597 = vpop.f32.mrf.mxu0
      %v598 = vadd.f32 0.0, %v597
      %599 = vmatmul.f32.gmra.mxu0 %v450
      %v600 = vpop.f32.mrf.mxu0
      %v601 = vadd.f32 0.0, %v600
      %602 = vmatmul.f32.gmra.mxu0 %v453
      %v603 = vpop.f32.mrf.mxu0
      %v604 = vadd.f32 0.0, %v603
      %605 = vmatmul.f32.gmra.mxu0 %v456
      %v606 = vpop.f32.mrf.mxu0
      %v607 = vadd.f32 0.0, %v606
      %608 = vmatmul.f32.gmra.mxu0 %v459
      %v609 = vpop.f32.mrf.mxu0
      %v610 = vadd.f32 0.0, %v609
      %611 = vmatmul.f32.gmra.mxu0 %v462
      %v612 = vpop.f32.mrf.mxu0
      %v613 = vadd.f32 0.0, %v612
      %614 = vmatmul.f32.gmra.mxu0 %v465
      %v615 = vpop.f32.mrf.mxu0
      %v616 = vadd.f32 0.0, %v615
      %617 = vmatmul.f32.gmra.mxu0 %v468
      %v618 = vpop.f32.mrf.mxu0
      %v619 = vadd.f32 0.0, %v618
      %620 = vmatmul.f32.gmra.mxu0 %v471
      %v621 = vpop.f32.mrf.mxu0
      %v622 = vadd.f32 0.0, %v621
      %623 = vmatmul.f32.gmra.mxu0 %v474
      %v624 = vpop.f32.mrf.mxu0
      %v625 = vadd.f32 0.0, %v624
      %626 = vmatmul.f32.gmra.mxu0 %v477
      %v627 = vpop.f32.mrf.mxu0
      %v628 = vadd.f32 0.0, %v627
      %629 = vmatmul.f32.gmra.mxu0 %v480
      %v630 = vpop.f32.mrf.mxu0
      %v631 = vadd.f32 0.0, %v630
      %632 = vdwg.mxu0
      %633 = vst.msk [vmem:[%s280] sm:$0xff] %vm547, %v586
      %634 = vst.msk [vmem:[%s280 + $0x8] sm:$0xff] %vm547, %v589
      %635 = vst.msk [vmem:[%s280 + $0x10] sm:$0xff] %vm547, %v592
      %636 = vst.msk [vmem:[%s280 + $0x18] sm:$0xff] %vm547, %v595
      %637 = vst.msk [vmem:[%s280 + $0x20] sm:$0xff] %vm547, %v598
      %638 = vst.msk [vmem:[%s280 + $0x28] sm:$0xff] %vm547, %v601
      %639 = vst.msk [vmem:[%s280 + $0x30] sm:$0xff] %vm547, %v604
      %640 = vst.msk [vmem:[%s280 + $0x38] sm:$0xff] %vm547, %v607
      %641 = vst.msk [vmem:[%s280 + $0x40] sm:$0xff] %vm547, %v610
      %642 = vst.msk [vmem:[%s280 + $0x48] sm:$0xff] %vm547, %v613
      %643 = vst.msk [vmem:[%s280 + $0x50] sm:$0xff] %vm547, %v616
      %644 = vst.msk [vmem:[%s280 + $0x58] sm:$0xff] %vm547, %v619
      %645 = vst.msk [vmem:[%s280 + $0x60] sm:$0xff] %vm547, %v622
      %646 = vst.msk [vmem:[%s280 + $0x68] sm:$0xff] %vm547, %v625
      %647 = vst.msk [vmem:[%s280 + $0x70] sm:$0xff] %vm547, %v628
      %648 = vst.msk [vmem:[%s280 + $0x78] sm:$0xff] %vm547, %v631
      %s649 = smul.u32 16, %s18
      %p650 = scmp.lt.s32.totalorder %s649, 47
      %s651 = scalar_select %p650, %s649, 47
      %s652 = smul.addr %s651, 4
      %s653 = scalar_lea.vmem %s4, %s652
      %s654 = smul.u32 16, %s18
      %p655 = scmp.lt.s32.totalorder %s654, 47
      %s656 = scalar_select %p655, %s654, 47
      %s657 = smul.addr %s656, 8
      %s658 = scalar_lea.vmem %s5, %s657
      %s659 = smul.u32 16, %s18
      %p660 = scmp.lt.s32.totalorder %s659, 47
      %s661 = scalar_select %p660, %s659, 47
      %s662 = smul.addr %s661, 8
      %s663 = scalar_lea.vmem %s6, %s662
      // Predicated region
      $region37: #{tpu_custom_call.1} parent=35 // pred_check
        %p664 = pneg %p125
      $region38: #{tpu_custom_call.1} parent=35 // pred_check_branch
        %666 = sbr.rel (%p664) target = $region40
      $region39: #{tpu_custom_call.1} parent=35 // pred_region
        %s667 = smul.u32 16, %s18
      $region40: #{tpu_custom_call.1} parent=35 // pred_fallthru
        _
      // Predicated region
      $region41: #{tpu_custom_call.1} parent=35 // pred_check
        %p668 = pneg %p151
      $region42: #{tpu_custom_call.1} parent=35 // pred_check_branch
        %670 = sbr.rel (%p668) target = $region44
      $region43: #{tpu_custom_call.1} parent=35 // pred_region
        %s671 = smul.u32 16, %s18
      $region44: #{tpu_custom_call.1} parent=35 // pred_fallthru
        _
      // Predicated region
      $region45: #{tpu_custom_call.1} parent=35 // pred_check
        %p672 = pneg %p177
      $region46: #{tpu_custom_call.1} parent=35 // pred_check_branch
        %674 = sbr.rel (%p672) target = $region48
      $region47: #{tpu_custom_call.1} parent=35 // pred_region
        %s675 = smul.u32 16, %s18
      $region48: #{tpu_custom_call.1} parent=35 // pred_fallthru
        _
    $region36: #{tpu_custom_call.1} parent=5 // pred_fallthru
      _
    %p676 = scmp.le.s32.totalorder 2, %s13
    // Predicated region
    $region49: #{tpu_custom_call.1} parent=5 // pred_check
      %p677 = pneg %p676
    $region50: #{tpu_custom_call.1} parent=5 // pred_check_branch
      %679 = sbr.rel (%p677) target = $region52
    $region51: #{tpu_custom_call.1} parent=5 // pred_region
      %s680 = ssub.s32 %s13, 2
      // Predicated region
      $region53: #{tpu_custom_call.1} parent=51 // pred_check
        %p681 = pneg %p131
      $region54: #{tpu_custom_call.1} parent=51 // pred_check_branch
        %683 = sbr.rel (%p681) target = $region56
      $region55: #{tpu_custom_call.1} parent=51 // pred_region
        %s684 = smul.u32 16, %s19
        %p685 = scmp.lt.s32.totalorder %s684, 47
        %s686 = scalar_select %p685, %s684, 47
        %s687 = smul.addr %s686, 4
        %s688 = scalar_lea.vmem %s4, %s687
      $region56: #{tpu_custom_call.1} parent=51 // pred_fallthru
        _
      // Predicated region
      $region57: #{tpu_custom_call.1} parent=51 // pred_check
        %p689 = pneg %p157
      $region58: #{tpu_custom_call.1} parent=51 // pred_check_branch
        %691 = sbr.rel (%p689) target = $region60
      $region59: #{tpu_custom_call.1} parent=51 // pred_region
        %s692 = smul.u32 16, %s19
        %p693 = scmp.lt.s32.totalorder %s692, 47
        %s694 = scalar_select %p693, %s692, 47
        %s695 = smul.addr %s694, 8
        %s696 = scalar_lea.vmem %s5, %s695
      $region60: #{tpu_custom_call.1} parent=51 // pred_fallthru
        _
      // Predicated region
      $region61: #{tpu_custom_call.1} parent=51 // pred_check
        %p697 = pneg %p183
      $region62: #{tpu_custom_call.1} parent=51 // pred_check_branch
        %699 = sbr.rel (%p697) target = $region64
      $region63: #{tpu_custom_call.1} parent=51 // pred_region
        %s700 = smul.u32 16, %s19
        %p701 = scmp.lt.s32.totalorder %s700, 47
        %s702 = scalar_select %p701, %s700, 47
        %s703 = smul.addr %s702, 8
        %s704 = scalar_lea.vmem %s6, %s703
      $region64: #{tpu_custom_call.1} parent=51 // pred_fallthru
        _
    $region52: #{tpu_custom_call.1} parent=5 // pred_fallthru
      _
  $region6: #{tpu_custom_call.1} parent=0 // loop_footer
    %s17 = sadd.s32 1, %s13
  $region7: #{tpu_custom_call.1} parent=0 // loop_footer_branch
    %12 = sbr.rel target = $region3
  $region8: #{tpu_custom_call.1} parent=0 // loop_exit
    _

</llo_original>
